<compile_context>
chip_gen: v7x
topology: tpu7x:2x2x1
jax: 0.10.0
libtpu: 0.0.40
codegen_flags: <defaults>
</compile_context>

<pallas_src>
import functools

import jax
import jax.numpy as jnp
from jax.experimental import pallas as pl
from jax.experimental.pallas import tpu as pltpu


F_PAD = 8   # pad K=6 -> 8 so the first matmul's contraction is sublane-aligned
H = 64      # hidden width
C = 3       # classes


def _round_up(n, m):
    return ((n + m - 1) // m) * m


# --------------------------------------------------------------------------
# Kernel
# --------------------------------------------------------------------------
def _mlp_kernel(x_ref, w1_ref, b1_ref, w2_ref, b2_ref, w3_ref, b3_ref, o_ref):
    # x_ref: [8, TB] bf16 (features padded 6->8, batch on lanes)
    x = x_ref[...]

    # fc1 + relu: [64, 8] @ [8, TB] -> [64, TB], f32 accumulate.
    # Bias add + ReLU fused with the bf16 cast so only the bf16 activation
    # stays live between matmuls.
    h1 = jnp.dot(w1_ref[...], x, preferred_element_type=jnp.float32)
    h1 = jnp.maximum(h1 + b1_ref[...], 0.0).astype(jnp.bfloat16)

    # fc2 + relu: [64, 64] @ [64, TB] -> [64, TB]
    h2 = jnp.dot(w2_ref[...], h1, preferred_element_type=jnp.float32)
    h2 = jnp.maximum(h2 + b2_ref[...], 0.0).astype(jnp.bfloat16)

    # fc3: [3, 64] @ [64, TB] -> [3, TB]
    logits = jnp.dot(w3_ref[...], h2, preferred_element_type=jnp.float32)
    logits = logits + b3_ref[...]

    # log_softmax over the class axis (3-row sublane reduce in this layout).
    m = jnp.max(logits, axis=0, keepdims=True)
    shifted = logits - m
    lse = jnp.log(jnp.sum(jnp.exp(shifted), axis=0, keepdims=True))
    o_ref[...] = (shifted - lse).astype(o_ref.dtype)


# --------------------------------------------------------------------------
# Parameter prep (done ONCE, outside the forward path)
# --------------------------------------------------------------------------
def prepare_params(params):
    """PyTorch-layout params (w [out,in] f32, b [out] f32) -> kernel layout.

    Weights go to bf16 (MXU inputs), w1 is zero-padded to K=8; biases stay
    f32 as [out, 1] columns (broadcast over lanes inside the kernel).
    """
    w1, b1, w2, b2, w3, b3 = params
    w1p = jnp.zeros((H, F_PAD), jnp.bfloat16).at[:, :6].set(w1.astype(jnp.bfloat16))
    w2b = w2.astype(jnp.bfloat16)
    w3b = w3.astype(jnp.bfloat16)
    b1c = b1.reshape(H, 1).astype(jnp.float32)
    b2c = b2.reshape(H, 1).astype(jnp.float32)
    b3c = b3.reshape(C, 1).astype(jnp.float32)
    return (w1p, b1c, w2b, b2c, w3b, b3c)


# --------------------------------------------------------------------------
# Transposed fast path: [F_PAD, B_pad] bf16 in -> [C, B_pad] out
# --------------------------------------------------------------------------
def bike_shifter_net_transposed(xt, prepped, *, block_b=4096, out_dtype=jnp.float32):
    """xt: [8, B_pad] bf16 (B_pad a multiple of 128, padding columns zero)."""
    w1p, b1c, w2b, b2c, w3b, b3c = prepped
    B_pad = xt.shape[1]
    assert xt.shape[0] == F_PAD and B_pad % 128 == 0

    # Lane tile: large (amortize per-step overhead), multiple of 128, and
    # capped so the grid has >= 2 steps when possible (v7x megacore sharding).
    block_b = _round_up(block_b, 128)
    two_step_cap = _round_up(max(-(-B_pad // 2), 128), 128)
    tb = min(block_b, two_step_cap, B_pad)
    B_grid = _round_up(B_pad, tb)
    if B_grid != B_pad:
        xt = jnp.pad(xt, ((0, 0), (0, B_grid - B_pad)))
    grid = (B_grid // tb,)

    flops = 2 * B_grid * (H * F_PAD + H * H + C * H)
    bytes_accessed = (B_grid * (F_PAD * 2 + C * jnp.dtype(out_dtype).itemsize)
                      + (H * F_PAD + H * H + C * H) * 2 + (H + H + C) * 4)
    cost = pl.CostEstimate(flops=flops, transcendentals=4 * B_grid,
                           bytes_accessed=bytes_accessed)

    out_t = pl.pallas_call(
        _mlp_kernel,
        out_shape=jax.ShapeDtypeStruct((C, B_grid), out_dtype),
        grid=grid,
        in_specs=[
            pl.BlockSpec((F_PAD, tb), lambda i: (0, i)),   # x tile (pipelined)
            pl.BlockSpec((H, F_PAD), lambda i: (0, 0)),    # w1 (grid-resident)
            pl.BlockSpec((H, 1), lambda i: (0, 0)),        # b1
            pl.BlockSpec((H, H), lambda i: (0, 0)),        # w2
            pl.BlockSpec((H, 1), lambda i: (0, 0)),        # b2
            pl.BlockSpec((C, H), lambda i: (0, 0)),        # w3
            pl.BlockSpec((C, 1), lambda i: (0, 0)),        # b3
        ],
        out_specs=pl.BlockSpec((C, tb), lambda i: (0, i)),
        compiler_params=pltpu.CompilerParams(
            dimension_semantics=("parallel",)),
        cost_estimate=cost,
    )(xt, w1p, b1c, w2b, b2c, w3b, b3c)

    return out_t[:, :B_pad]


# --------------------------------------------------------------------------
# Convenience wrapper keeping the PyTorch [B, 6] -> [B, 3] contract
# --------------------------------------------------------------------------
def _xla_forward(x, prepped):
    """Tiny-batch fallback: same bf16-input / f32-accumulate math, plain XLA."""
    w1p, b1c, w2b, b2c, w3b, b3c = prepped
    hp = jax.lax.Precision.HIGHEST
    xb = x.astype(jnp.bfloat16)
    h1 = jnp.maximum(
        jnp.dot(xb, w1p[:, :6].T, precision=hp,
                preferred_element_type=jnp.float32) + b1c[:, 0], 0.0)
    h2 = jnp.maximum(
        jnp.dot(h1.astype(jnp.bfloat16), w2b.T, precision=hp,
                preferred_element_type=jnp.float32) + b2c[:, 0], 0.0)
    logits = jnp.dot(h2.astype(jnp.bfloat16), w3b.T, precision=hp,
                     preferred_element_type=jnp.float32) + b3c[:, 0]
    return jax.nn.log_softmax(logits, axis=1)


@functools.partial(jax.jit, static_argnames=("block_b", "min_pallas_batch",
                                             "force_pallas"))
def bike_shifter_net(x, prepped, *, block_b=4096, min_pallas_batch=1024,
                     force_pallas=False):
    """x: [B, 6] float32 -> [B, 3] float32 log-probabilities.

    `prepped` comes from prepare_params() (hoisted out of the forward path).
    Tiny batches are routed to plain XLA unless force_pallas=True, since the
    Pallas call would be pure launch/DMA overhead there.
    """
    B = x.shape[0]
    if (not force_pallas) and B < min_pallas_batch:
        return _xla_forward(x, prepped)

    B_pad = _round_up(B, 128)
    # Transposed, lane-dense, bf16 input: [8, B_pad] (zeros in the padding).
    # NOTE: this transpose/pad/cast is layout plumbing for the [B, 6] API;
    # callers that can produce [8, B] bf16 directly should use
    # bike_shifter_net_transposed() and skip it.
    xt = jnp.zeros((F_PAD, B_pad), jnp.bfloat16)
    xt = xt.at[:6, :B].set(x.T.astype(jnp.bfloat16))

    out_t = bike_shifter_net_transposed(xt, prepped, block_b=block_b)
    # Padded columns (B..B_pad) hold bias-only log-softmax values; slice off.
    return out_t[:, :B].T


# --------------------------------------------------------------------------
# Init / reference
# --------------------------------------------------------------------------
def init_params(key):
    """PyTorch nn.Linear-style init: w [out, in], b [out], U(+/- 1/sqrt(fan_in))."""
    dims = [(6, 64), (64, 64), (64, 3)]
    params = []
    for fan_in, fan_out in dims:
        key, kw, kb = jax.random.split(key, 3)
        bound = 1.0 / jnp.sqrt(jnp.float32(fan_in))
        w = jax.random.uniform(kw, (fan_out, fan_in), jnp.float32, -bound, bound)
        b = jax.random.uniform(kb, (fan_out,), jnp.float32, -bound, bound)
        params += [w, b]
    return tuple(params)


def reference_forward(x, params):
    """Plain-JAX reference matching the kernel's bf16-input / f32-accumulate
    math. NOTE: not bit-identical to a pure-f32 PyTorch forward (~1e-3 logit
    error from the bf16 quantization of x and the weights)."""
    w1, b1, w2, b2, w3, b3 = params
    bf = lambda a: a.astype(jnp.bfloat16).astype(jnp.float32)
    hp = jax.lax.Precision.HIGHEST
    h1 = jnp.maximum(jnp.dot(bf(x), bf(w1).T, precision=hp) + b1, 0.0)
    h2 = jnp.maximum(jnp.dot(bf(h1), bf(w2).T, precision=hp) + b2, 0.0)
    logits = jnp.dot(bf(h2), bf(w3).T, precision=hp) + b3
    return jax.nn.log_softmax(logits, axis=1)


# --------------------------------------------------------------------------
# Test
# --------------------------------------------------------------------------
if __name__ == "__main__":
    key = jax.random.PRNGKey(0)
    kx, kp = jax.random.split(key)
    params = init_params(kp)
    prepped = prepare_params(params)   # hoisted parameter prep (done once)

    # Exercise: (a) B not a tile multiple -> padding/tail handling, single
    # small kernel; (b) larger B with a multi-step pipelined batch grid.
    for B, blk in ((300, 4096), (2048, 512)):
        x = jax.random.normal(jax.random.fold_in(kx, B), (B, 6), jnp.float32)
        out = jax.block_until_ready(
            bike_shifter_net(x, prepped, block_b=blk, force_pallas=True))
        ref = reference_forward(x, params)
        assert out.shape == (B, 3), out.shape
        assert bool(jnp.all(jnp.isfinite(out))), "non-finite output"
        err = float(jnp.max(jnp.abs(out - ref)))
        assert jnp.allclose(out, ref, atol=1e-4, rtol=1e-4), (
            f"mismatch, max abs err={err}")

    # Tiny-batch auto-dispatch path (plain XLA) also matches the reference.
    x_small = jax.random.normal(jax.random.fold_in(kx, 7), (16, 6), jnp.float32)
    out_small = jax.block_until_ready(bike_shifter_net(x_small, prepped))
    ref_small = reference_forward(x_small, params)
    assert jnp.allclose(out_small, ref_small, atol=1e-4, rtol=1e-4)

    print("KERNEL_OK")
</pallas_src>

<mosaic_0001>
module attributes {stable_mosaic.version = 11 : i64} {
  func.func @_mlp_kernel(%arg0: i32, %arg1: memref<8x256xbf16, #tpu.memory_space<vmem>>, %arg2: memref<64x8xbf16, #tpu.memory_space<vmem>>, %arg3: memref<64x1xf32, #tpu.memory_space<vmem>>, %arg4: memref<64x64xbf16, #tpu.memory_space<vmem>>, %arg5: memref<64x1xf32, #tpu.memory_space<vmem>>, %arg6: memref<3x64xbf16, #tpu.memory_space<vmem>>, %arg7: memref<3x1xf32, #tpu.memory_space<vmem>>, %arg8: memref<3x256xf32, #tpu.memory_space<vmem>>) attributes {dimension_semantics = [#tpu.dimension_semantics<parallel>], iteration_bounds = array<i64: 2>, scalar_prefetch = 0 : i64, scratch_operands = 0 : i64, tpu.core_type = #tpu.core_type<tc>, window_params = [{transform_indices = @transform_0, window_bounds = array<i64: 8, 256>}, {pipeline_mode = #tpu.pipeline_mode<synchronous>, transform_indices = @transform_1, window_bounds = array<i64: 64, 8>}, {pipeline_mode = #tpu.pipeline_mode<synchronous>, transform_indices = @transform_2, window_bounds = array<i64: 64, 1>}, {pipeline_mode = #tpu.pipeline_mode<synchronous>, transform_indices = @transform_3, window_bounds = array<i64: 64, 64>}, {pipeline_mode = #tpu.pipeline_mode<synchronous>, transform_indices = @transform_4, window_bounds = array<i64: 64, 1>}, {pipeline_mode = #tpu.pipeline_mode<synchronous>, transform_indices = @transform_5, window_bounds = array<i64: 3, 64>}, {pipeline_mode = #tpu.pipeline_mode<synchronous>, transform_indices = @transform_6, window_bounds = array<i64: 3, 1>}, {transform_indices = @transform_7, window_bounds = array<i64: 3, 256>}]} {
    %c0 = arith.constant 0 : index
    %c0_0 = arith.constant 0 : index
    %0 = vector.load %arg1[%c0, %c0_0] : memref<8x256xbf16, #tpu.memory_space<vmem>>, vector<8x256xbf16>
    %c0_1 = arith.constant 0 : index
    %c0_2 = arith.constant 0 : index
    %1 = vector.load %arg2[%c0_1, %c0_2] : memref<64x8xbf16, #tpu.memory_space<vmem>>, vector<64x8xbf16>
    %cst = arith.constant dense<0.000000e+00> : vector<64x256xf32>
    %2 = tpu.matmul %1, %0, %cst {dimension_numbers = #tpu.dot_dimension_numbers<[1], [0], [0], [1], [0, 0, 1, 1], [], []>} : vector<64x8xbf16>, vector<8x256xbf16>, vector<64x256xf32> -> vector<64x256xf32>
    %c0_3 = arith.constant 0 : index
    %c0_4 = arith.constant 0 : index
    %3 = vector.load %arg3[%c0_3, %c0_4] : memref<64x1xf32, #tpu.memory_space<vmem>>, vector<64x1xf32>
    %4 = vector.broadcast %3 : vector<64x1xf32> to vector<64x256xf32>
    %5 = arith.addf %2, %4 : vector<64x256xf32>
    %cst_5 = arith.constant 0.000000e+00 : f32
    %6 = vector.broadcast %cst_5 : f32 to vector<64x256xf32>
    %7 = arith.maximumf %5, %6 : vector<64x256xf32>
    %8 = arith.truncf %7 : vector<64x256xf32> to vector<64x256xbf16>
    %c0_6 = arith.constant 0 : index
    %c0_7 = arith.constant 0 : index
    %9 = vector.load %arg4[%c0_6, %c0_7] : memref<64x64xbf16, #tpu.memory_space<vmem>>, vector<64x64xbf16>
    %cst_8 = arith.constant dense<0.000000e+00> : vector<64x256xf32>
    %10 = tpu.matmul %9, %8, %cst_8 {dimension_numbers = #tpu.dot_dimension_numbers<[1], [0], [0], [1], [0, 0, 1, 1], [], []>} : vector<64x64xbf16>, vector<64x256xbf16>, vector<64x256xf32> -> vector<64x256xf32>
    %c0_9 = arith.constant 0 : index
    %c0_10 = arith.constant 0 : index
    %11 = vector.load %arg5[%c0_9, %c0_10] : memref<64x1xf32, #tpu.memory_space<vmem>>, vector<64x1xf32>
    %12 = vector.broadcast %11 : vector<64x1xf32> to vector<64x256xf32>
    %13 = arith.addf %10, %12 : vector<64x256xf32>
    %cst_11 = arith.constant 0.000000e+00 : f32
    %14 = vector.broadcast %cst_11 : f32 to vector<64x256xf32>
    %15 = arith.maximumf %13, %14 : vector<64x256xf32>
    %16 = arith.truncf %15 : vector<64x256xf32> to vector<64x256xbf16>
    %c0_12 = arith.constant 0 : index
    %c0_13 = arith.constant 0 : index
    %17 = vector.load %arg6[%c0_12, %c0_13] : memref<3x64xbf16, #tpu.memory_space<vmem>>, vector<3x64xbf16>
    %cst_14 = arith.constant dense<0.000000e+00> : vector<3x256xf32>
    %18 = tpu.matmul %17, %16, %cst_14 {dimension_numbers = #tpu.dot_dimension_numbers<[1], [0], [0], [1], [0, 0, 1, 1], [], []>} : vector<3x64xbf16>, vector<64x256xbf16>, vector<3x256xf32> -> vector<3x256xf32>
    %c0_15 = arith.constant 0 : index
    %c0_16 = arith.constant 0 : index
    %19 = vector.load %arg7[%c0_15, %c0_16] : memref<3x1xf32, #tpu.memory_space<vmem>>, vector<3x1xf32>
    %20 = vector.broadcast %19 : vector<3x1xf32> to vector<3x256xf32>
    %21 = arith.addf %18, %20 : vector<3x256xf32>
    %cst_17 = arith.constant dense<0xFF800000> : vector<256xf32>
    %22 = vector.multi_reduction <maximumf>, %21, %cst_17 [0] : vector<3x256xf32> to vector<256xf32>
    %23 = vector.shape_cast %22 : vector<256xf32> to vector<1x256xf32>
    %24 = vector.broadcast %23 : vector<1x256xf32> to vector<3x256xf32>
    %25 = arith.subf %21, %24 : vector<3x256xf32>
    %26 = math.exp %25 : vector<3x256xf32>
    %cst_18 = arith.constant dense<0.000000e+00> : vector<256xf32>
    %27 = vector.multi_reduction <add>, %26, %cst_18 [0] : vector<3x256xf32> to vector<256xf32>
    %28 = vector.shape_cast %27 : vector<256xf32> to vector<1x256xf32>
    %29 = math.log %28 : vector<1x256xf32>
    %30 = vector.broadcast %29 : vector<1x256xf32> to vector<3x256xf32>
    %31 = arith.subf %25, %30 : vector<3x256xf32>
    %c0_19 = arith.constant 0 : index
    %c0_20 = arith.constant 0 : index
    %32 = vector.load %arg8[%c0_19, %c0_20] : memref<3x256xf32, #tpu.memory_space<vmem>>, vector<3x256xf32>
    tpu.vector_store %arg8[%c0_19, %c0_20], %31 {strides = array<i32>} : memref<3x256xf32, #tpu.memory_space<vmem>>, vector<3x256xf32>,
    return
  }
  func.func @transform_0(%arg0: i32) -> (i32, i32) {
    %c0_i32 = arith.constant 0 : i32
    %c0_i32_0 = arith.constant 0 : i32
    return %c0_i32, %arg0 : i32, i32
  }
  func.func @transform_1(%arg0: i32) -> (i32, i32) {
    %c0_i32 = arith.constant 0 : i32
    %c0_i32_0 = arith.constant 0 : i32
    %c0_i32_1 = arith.constant 0 : i32
    return %c0_i32, %c0_i32_0 : i32, i32
  }
  func.func @transform_2(%arg0: i32) -> (i32, i32) {
    %c0_i32 = arith.constant 0 : i32
    %c0_i32_0 = arith.constant 0 : i32
    %c0_i32_1 = arith.constant 0 : i32
    return %c0_i32, %c0_i32_0 : i32, i32
  }
  func.func @transform_3(%arg0: i32) -> (i32, i32) {
    %c0_i32 = arith.constant 0 : i32
    %c0_i32_0 = arith.constant 0 : i32
    %c0_i32_1 = arith.constant 0 : i32
    return %c0_i32, %c0_i32_0 : i32, i32
  }
  func.func @transform_4(%arg0: i32) -> (i32, i32) {
    %c0_i32 = arith.constant 0 : i32
    %c0_i32_0 = arith.constant 0 : i32
    %c0_i32_1 = arith.constant 0 : i32
    return %c0_i32, %c0_i32_0 : i32, i32
  }
  func.func @transform_5(%arg0: i32) -> (i32, i32) {
    %c0_i32 = arith.constant 0 : i32
    %c0_i32_0 = arith.constant 0 : i32
    %c0_i32_1 = arith.constant 0 : i32
    return %c0_i32, %c0_i32_0 : i32, i32
  }
  func.func @transform_6(%arg0: i32) -> (i32, i32) {
    %c0_i32 = arith.constant 0 : i32
    %c0_i32_0 = arith.constant 0 : i32
    %c0_i32_1 = arith.constant 0 : i32
    return %c0_i32, %c0_i32_0 : i32, i32
  }
  func.func @transform_7(%arg0: i32) -> (i32, i32) {
    %c0_i32 = arith.constant 0 : i32
    %c0_i32_0 = arith.constant 0 : i32
    return %c0_i32, %arg0 : i32, i32
  }
}

</mosaic_0001>

<llo_original>
// kernel: bike_shifter_net.1
$region0: #{bike_shifter_net.1}
  #allocation0 [shape = 'u32[]', space=smem, size = 0x4, offset = 0x4, fixed_abs, tag = 'smem constant byte address 0x4 - core index']
  #allocation1 [shape = 'u32[144,128]{1,0:T(1,128)}', space=vmem, size = 0x12000, scoped, tag = 'internal scratch']
  %s0 = inlined_call_operand.vmem [shape: bf16[8,512], index: 0, kind: input, shape index: {}]
  %s1 = inlined_call_operand.vmem [shape: bf16[64,8], index: 1, kind: input, shape index: {}]
  %s2 = inlined_call_operand.vmem [shape: f32[64,1], index: 2, kind: input, shape index: {}]
  %s3 = inlined_call_operand.vmem [shape: bf16[64,64], index: 3, kind: input, shape index: {}]
  %s4 = inlined_call_operand.vmem [shape: f32[64,1], index: 4, kind: input, shape index: {}]
  %s5 = inlined_call_operand.vmem [shape: bf16[3,64], index: 5, kind: input, shape index: {}]
  %s6 = inlined_call_operand.vmem [shape: f32[3,1], index: 6, kind: input, shape index: {}]
  %s7 = inlined_call_operand.vmem [shape: f32[3,512], index: 7, kind: output, shape index: {}]
  %s8 = sld [smem:[#allocation0]]
  $region61: #{bike_shifter_net.1} parent=0
    _
  %s10 = ssub.s32 1, %s8
  %s11 = scalar_select 0, %s10, %s8
  loop: start=0, step=1, limit=4
  $region2: #{bike_shifter_net.1} parent=0 // loop_pre_header
    _
  $region3: #{bike_shifter_net.1} parent=0 // loop_header
    %s13 = sphi 0, %s17
    %p14 = scmp.ge.s32.totalorder %s13, 4
    %s23 = sphi 0, %s25
    %s26 = sphi 0, %s23
    %s27 = sphi 0, %s26
    %s43 = sphi 0, %s27
    %s47 = sphi 0, %s47
    %s49 = sphi 0, %s47
    %s50 = sphi 0, %s49
    %s64 = sphi 0, %s50
    %s68 = sphi 0, %s68
    %s70 = sphi 0, %s68
    %s71 = sphi 0, %s70
    %s85 = sphi 0, %s71
    %s89 = sphi 0, %s89
    %s91 = sphi 0, %s89
    %s92 = sphi 0, %s91
    %s106 = sphi 0, %s92
    %s110 = sphi 0, %s110
    %s112 = sphi 0, %s110
    %s113 = sphi 0, %s112
    %s127 = sphi 0, %s113
    %s131 = sphi 0, %s131
    %s133 = sphi 0, %s131
    %s134 = sphi 0, %s133
    %s148 = sphi 0, %s134
    %s152 = sphi 0, %s152
    %s154 = sphi 0, %s152
    %s155 = sphi 0, %s154
    %s169 = sphi 0, %s155
    %s175 = sphi 0, %s177
    %s178 = sphi 0, %s175
    %s179 = sphi 0, %s178
    %s195 = sphi 0, %s179
  $region4: #{bike_shifter_net.1} parent=0 // loop_header_branch
    %16 = sbr.rel (%p14) target = $region8
  $region5: #{bike_shifter_net.1} parent=0 // loop_body
    %s18 = ssub.s32 %s13, 1
    %s19 = ssub.s32 %s13, 2
    %s20 = sadd.s32 %s13, 1
    %s21 = ssub.s32 %s13, %s20
    %p22 = scmp.eq.s32.totalorder %s21, 0
    %s24 = sadd.s32 %s23, 1
    %s25 = scalar_select %p22, %s23, %s24
    %p28 = pneg %p22
    %p29 = scmp.eq.s32.totalorder %s13, 1
    %p30 = por %p28, %p29
    %p31 = scmp.ne.s32.totalorder %s23, %s26
    %p32 = scmp.eq.s32.totalorder %s13, 0
    %p33 = por %p31, %p32
    %p34 = scmp.ne.s32.totalorder %s23, %s26
    %p35 = scmp.eq.s32.totalorder %s18, 1
    %p36 = por %p34, %p35
    %p37 = scmp.ne.s32.totalorder %s26, %s27
    %p38 = scmp.eq.s32.totalorder %s18, 0
    %p39 = por %p37, %p38
    %p40 = scmp.ne.s32.totalorder %s26, %s27
    %p41 = scmp.eq.s32.totalorder %s19, 1
    %p42 = por %p40, %p41
    %p44 = scmp.ne.s32.totalorder %s27, %s43
    %p45 = scmp.eq.s32.totalorder %s19, 0
    %p46 = por %p44, %p45
    %s48 = sadd.s32 %s47, 1
    %p51 = scmp.eq.s32.totalorder %s13, 1
    %p52 = scmp.ne.s32.totalorder %s47, %s49
    %p53 = scmp.eq.s32.totalorder %s13, 0
    %p54 = por %p52, %p53
    %p55 = scmp.ne.s32.totalorder %s47, %s49
    %p56 = scmp.eq.s32.totalorder %s18, 1
    %p57 = por %p55, %p56
    %p58 = scmp.ne.s32.totalorder %s49, %s50
    %p59 = scmp.eq.s32.totalorder %s18, 0
    %p60 = por %p58, %p59
    %p61 = scmp.ne.s32.totalorder %s49, %s50
    %p62 = scmp.eq.s32.totalorder %s19, 1
    %p63 = por %p61, %p62
    %p65 = scmp.ne.s32.totalorder %s50, %s64
    %p66 = scmp.eq.s32.totalorder %s19, 0
    %p67 = por %p65, %p66
    %s69 = sadd.s32 %s68, 1
    %p72 = scmp.eq.s32.totalorder %s13, 1
    %p73 = scmp.ne.s32.totalorder %s68, %s70
    %p74 = scmp.eq.s32.totalorder %s13, 0
    %p75 = por %p73, %p74
    %p76 = scmp.ne.s32.totalorder %s68, %s70
    %p77 = scmp.eq.s32.totalorder %s18, 1
    %p78 = por %p76, %p77
    %p79 = scmp.ne.s32.totalorder %s70, %s71
    %p80 = scmp.eq.s32.totalorder %s18, 0
    %p81 = por %p79, %p80
    %p82 = scmp.ne.s32.totalorder %s70, %s71
    %p83 = scmp.eq.s32.totalorder %s19, 1
    %p84 = por %p82, %p83
    %p86 = scmp.ne.s32.totalorder %s71, %s85
    %p87 = scmp.eq.s32.totalorder %s19, 0
    %p88 = por %p86, %p87
    %s90 = sadd.s32 %s89, 1
    %p93 = scmp.eq.s32.totalorder %s13, 1
    %p94 = scmp.ne.s32.totalorder %s89, %s91
    %p95 = scmp.eq.s32.totalorder %s13, 0
    %p96 = por %p94, %p95
    %p97 = scmp.ne.s32.totalorder %s89, %s91
    %p98 = scmp.eq.s32.totalorder %s18, 1
    %p99 = por %p97, %p98
    %p100 = scmp.ne.s32.totalorder %s91, %s92
    %p101 = scmp.eq.s32.totalorder %s18, 0
    %p102 = por %p100, %p101
    %p103 = scmp.ne.s32.totalorder %s91, %s92
    %p104 = scmp.eq.s32.totalorder %s19, 1
    %p105 = por %p103, %p104
    %p107 = scmp.ne.s32.totalorder %s92, %s106
    %p108 = scmp.eq.s32.totalorder %s19, 0
    %p109 = por %p107, %p108
    %s111 = sadd.s32 %s110, 1
    %p114 = scmp.eq.s32.totalorder %s13, 1
    %p115 = scmp.ne.s32.totalorder %s110, %s112
    %p116 = scmp.eq.s32.totalorder %s13, 0
    %p117 = por %p115, %p116
    %p118 = scmp.ne.s32.totalorder %s110, %s112
    %p119 = scmp.eq.s32.totalorder %s18, 1
    %p120 = por %p118, %p119
    %p121 = scmp.ne.s32.totalorder %s112, %s113
    %p122 = scmp.eq.s32.totalorder %s18, 0
    %p123 = por %p121, %p122
    %p124 = scmp.ne.s32.totalorder %s112, %s113
    %p125 = scmp.eq.s32.totalorder %s19, 1
    %p126 = por %p124, %p125
    %p128 = scmp.ne.s32.totalorder %s113, %s127
    %p129 = scmp.eq.s32.totalorder %s19, 0
    %p130 = por %p128, %p129
    %s132 = sadd.s32 %s131, 1
    %p135 = scmp.eq.s32.totalorder %s13, 1
    %p136 = scmp.ne.s32.totalorder %s131, %s133
    %p137 = scmp.eq.s32.totalorder %s13, 0
    %p138 = por %p136, %p137
    %p139 = scmp.ne.s32.totalorder %s131, %s133
    %p140 = scmp.eq.s32.totalorder %s18, 1
    %p141 = por %p139, %p140
    %p142 = scmp.ne.s32.totalorder %s133, %s134
    %p143 = scmp.eq.s32.totalorder %s18, 0
    %p144 = por %p142, %p143
    %p145 = scmp.ne.s32.totalorder %s133, %s134
    %p146 = scmp.eq.s32.totalorder %s19, 1
    %p147 = por %p145, %p146
    %p149 = scmp.ne.s32.totalorder %s134, %s148
    %p150 = scmp.eq.s32.totalorder %s19, 0
    %p151 = por %p149, %p150
    %s153 = sadd.s32 %s152, 1
    %p156 = scmp.eq.s32.totalorder %s13, 1
    %p157 = scmp.ne.s32.totalorder %s152, %s154
    %p158 = scmp.eq.s32.totalorder %s13, 0
    %p159 = por %p157, %p158
    %p160 = scmp.ne.s32.totalorder %s152, %s154
    %p161 = scmp.eq.s32.totalorder %s18, 1
    %p162 = por %p160, %p161
    %p163 = scmp.ne.s32.totalorder %s154, %s155
    %p164 = scmp.eq.s32.totalorder %s18, 0
    %p165 = por %p163, %p164
    %p166 = scmp.ne.s32.totalorder %s154, %s155
    %p167 = scmp.eq.s32.totalorder %s19, 1
    %p168 = por %p166, %p167
    %p170 = scmp.ne.s32.totalorder %s155, %s169
    %p171 = scmp.eq.s32.totalorder %s19, 0
    %p172 = por %p170, %p171
    %s173 = ssub.s32 %s13, %s20
    %p174 = scmp.eq.s32.totalorder %s173, 0
    %s176 = sadd.s32 %s175, 1
    %s177 = scalar_select %p174, %s175, %s176
    %p180 = pneg %p174
    %p181 = scmp.eq.s32.totalorder %s13, 1
    %p182 = por %p180, %p181
    %p183 = scmp.ne.s32.totalorder %s175, %s178
    %p184 = scmp.eq.s32.totalorder %s13, 0
    %p185 = por %p183, %p184
    %p186 = scmp.ne.s32.totalorder %s175, %s178
    %p187 = scmp.eq.s32.totalorder %s18, 1
    %p188 = por %p186, %p187
    %p189 = scmp.ne.s32.totalorder %s178, %s179
    %p190 = scmp.eq.s32.totalorder %s18, 0
    %p191 = por %p189, %p190
    %p192 = scmp.ne.s32.totalorder %s178, %s179
    %p193 = scmp.eq.s32.totalorder %s19, 1
    %p194 = por %p192, %p193
    %p196 = scmp.ne.s32.totalorder %s179, %s195
    %p197 = scmp.eq.s32.totalorder %s19, 0
    %p198 = por %p196, %p197
    %p199 = scmp.le.s32.totalorder 1, %s13
    %p200 = scmp.lt.s32.totalorder %s13, 3
    %p201 = pnand %p199, %p200
    %p202 = pneg %p201
    // Predicated region
    $region9: #{bike_shifter_net.1} parent=5 // pred_check
      _
    $region10: #{bike_shifter_net.1} parent=5 // pred_check_branch
      %204 = sbr.rel (%p201) target = $region12
    $region11: #{bike_shifter_net.1} parent=5 // pred_region
      %s205 = ssub.s32 %s13, 1
      // Predicated region
      $region13: #{bike_shifter_net.1} parent=11 // pred_check
        %p206 = pneg %p60
      $region14: #{bike_shifter_net.1} parent=11 // pred_check_branch
        %208 = sbr.rel (%p206) target = $region16
      $region15: #{bike_shifter_net.1} parent=11 // pred_region
        _
      $region16: #{bike_shifter_net.1} parent=11 // pred_fallthru
        _
      // Predicated region
      $region17: #{bike_shifter_net.1} parent=11 // pred_check
        %p209 = pneg %p81
      $region18: #{bike_shifter_net.1} parent=11 // pred_check_branch
        %211 = sbr.rel (%p209) target = $region20
      $region19: #{bike_shifter_net.1} parent=11 // pred_region
        _
      $region20: #{bike_shifter_net.1} parent=11 // pred_fallthru
        _
      // Predicated region
      $region21: #{bike_shifter_net.1} parent=11 // pred_check
        %p212 = pneg %p102
      $region22: #{bike_shifter_net.1} parent=11 // pred_check_branch
        %214 = sbr.rel (%p212) target = $region24
      $region23: #{bike_shifter_net.1} parent=11 // pred_region
        _
      $region24: #{bike_shifter_net.1} parent=11 // pred_fallthru
        _
      // Predicated region
      $region25: #{bike_shifter_net.1} parent=11 // pred_check
        %p215 = pneg %p123
      $region26: #{bike_shifter_net.1} parent=11 // pred_check_branch
        %217 = sbr.rel (%p215) target = $region28
      $region27: #{bike_shifter_net.1} parent=11 // pred_region
        _
      $region28: #{bike_shifter_net.1} parent=11 // pred_fallthru
        _
      // Predicated region
      $region29: #{bike_shifter_net.1} parent=11 // pred_check
        %p218 = pneg %p144
      $region30: #{bike_shifter_net.1} parent=11 // pred_check_branch
        %220 = sbr.rel (%p218) target = $region32
      $region31: #{bike_shifter_net.1} parent=11 // pred_region
        _
      $region32: #{bike_shifter_net.1} parent=11 // pred_fallthru
        _
      // Predicated region
      $region33: #{bike_shifter_net.1} parent=11 // pred_check
        %p221 = pneg %p165
      $region34: #{bike_shifter_net.1} parent=11 // pred_check_branch
        %223 = sbr.rel (%p221) target = $region36
      $region35: #{bike_shifter_net.1} parent=11 // pred_region
        _
      $region36: #{bike_shifter_net.1} parent=11 // pred_fallthru
        _
    $region12: #{bike_shifter_net.1} parent=5 // pred_fallthru
      _
    %p224 = scmp.lt.s32.totalorder %s13, 2
    // Predicated region
    $region37: #{bike_shifter_net.1} parent=5 // pred_check
      %p225 = pneg %p224
    $region38: #{bike_shifter_net.1} parent=5 // pred_check_branch
      %227 = sbr.rel (%p225) target = $region40
    $region39: #{bike_shifter_net.1} parent=5 // pred_region
      // Predicated region
      $region41: #{bike_shifter_net.1} parent=39 // pred_check
        %p228 = pneg %p33
      $region42: #{bike_shifter_net.1} parent=39 // pred_check_branch
        %230 = sbr.rel (%p228) target = $region44
      $region43: #{bike_shifter_net.1} parent=39 // pred_region
        %s231 = smul.u32 2, %s13
        %p232 = scmp.lt.s32.totalorder %s231, 3
        %s233 = scalar_select %p232, %s231, 3
        %s234 = smul.addr %s233, 4
        %s235 = scalar_lea.vmem %s0, %s234
        %s236 = smul.u32 2, %s13
      $region44: #{bike_shifter_net.1} parent=39 // pred_fallthru
        _
    $region40: #{bike_shifter_net.1} parent=5 // pred_fallthru
      _
    %p237 = scmp.le.s32.totalorder 1, %s13
    %p238 = scmp.lt.s32.totalorder %s13, 3
    %p239 = pnand %p237, %p238
    %p240 = pneg %p239
    // Predicated region
    $region45: #{bike_shifter_net.1} parent=5 // pred_check
      _
    $region46: #{bike_shifter_net.1} parent=5 // pred_check_branch
      %242 = sbr.rel (%p239) target = $region48
    $region47: #{bike_shifter_net.1} parent=5 // pred_region
      %s243 = ssub.s32 %s13, 1
      %s244 = smul.u32 2, %s18
      %p245 = scmp.lt.s32.totalorder %s244, 3
      %s246 = scalar_select %p245, %s244, 3
      %s247 = smul.addr %s246, 4
      %s248 = scalar_lea.vmem %s0, %s247
      %p249 = pneg %p39
      %p250 = pneg %p36
      %p251 = pneg %p60
      %p252 = pneg %p57
      %p253 = pneg %p81
      %p254 = pneg %p78
      %p255 = pneg %p102
      %p256 = pneg %p99
      %p257 = pneg %p123
      %p258 = pneg %p120
      %p259 = pneg %p144
      %p260 = pneg %p141
      %p261 = pneg %p165
      %p262 = pneg %p162
      %p263 = pneg %p191
      %p264 = pneg %p188
      %s265 = smul.u32 2, %s18
      %p266 = scmp.lt.s32.totalorder %s265, 3
      %s267 = scalar_select %p266, %s265, 3
      %s268 = smul.addr %s267, 4
      %s269 = scalar_lea.vmem %s7, %s268
      %s270 = smul.u32 2, %s18
      %p271 = scmp.lt.s32.totalorder %s270, 3
      %s272 = scalar_select %p271, %s270, 3
      %s273 = smul.addr %s272, 4
      %s274 = scalar_lea.vmem %s0, %s273
      %s275 = smul.u32 2, %s18
      %s276 = smul.u32 2, %s18
      %p277 = scmp.lt.s32.totalorder %s276, 3
      %s278 = scalar_select %p277, %s276, 3
      %s279 = smul.addr %s278, 4
      %s280 = scalar_lea.vmem %s7, %s279
      %s281 = smul.u32 2, %s18
      %v283 = vld [vmem:[%s274] sm:$0xff]
      %v284 = vld [vmem:[%s1] sm:$0xf]
      %v285 = vld [vmem:[%s1 + $0x4] sm:$0xf]
      %v286 = vld [vmem:[%s1 + $0x8] sm:$0xf]
      %v287 = vld [vmem:[%s1 + $0xc] sm:$0xf]
      %v288 = vld [vmem:[%s1 + $0x10] sm:$0xf]
      %v289 = vld [vmem:[%s1 + $0x14] sm:$0xf]
      %v290 = vld [vmem:[%s1 + $0x18] sm:$0xf]
      %v291 = vld [vmem:[%s1 + $0x1c] sm:$0xf]
      %v292 = vld [vmem:[%s2] sm:$0xff]
      %v293 = vld [vmem:[%s2 + $0x8] sm:$0xff]
      %v294 = vld [vmem:[%s2 + $0x10] sm:$0xff]
      %v295 = vld [vmem:[%s2 + $0x18] sm:$0xff]
      %v296 = vld [vmem:[%s2 + $0x20] sm:$0xff]
      %v297 = vld [vmem:[%s2 + $0x28] sm:$0xff]
      %v298 = vld [vmem:[%s2 + $0x30] sm:$0xff]
      %v299 = vld [vmem:[%s2 + $0x38] sm:$0xff]
      %301 = vset.pattern.permute.xlu0 0
      %302 = vperm.xlu0 %301, %v292
      %v303 = vpop.permute.xlu0 %302
      %306 = vset.pattern.permute.xlu0 0
      %307 = vperm.xlu0 %306, %v293
      %v308 = vpop.permute.xlu0 %307
      %311 = vset.pattern.permute.xlu0 0
      %312 = vperm.xlu0 %311, %v294
      %v313 = vpop.permute.xlu0 %312
      %316 = vset.pattern.permute.xlu0 0
      %317 = vperm.xlu0 %316, %v295
      %v318 = vpop.permute.xlu0 %317
      %321 = vset.pattern.permute.xlu0 0
      %322 = vperm.xlu0 %321, %v296
      %v323 = vpop.permute.xlu0 %322
      %326 = vset.pattern.permute.xlu0 0
      %327 = vperm.xlu0 %326, %v297
      %v328 = vpop.permute.xlu0 %327
      %331 = vset.pattern.permute.xlu0 0
      %332 = vperm.xlu0 %331, %v298
      %v333 = vpop.permute.xlu0 %332
      %336 = vset.pattern.permute.xlu0 0
      %337 = vperm.xlu0 %336, %v299
      %v338 = vpop.permute.xlu0 %337
      %v348 = vunpack.c.l.b16 %v284
      %v349 = vunpack.c.l.b16 %v285
      %v350 = vunpack.c.l.b16 %v286
      %v351 = vunpack.c.l.b16 %v287
      %v352 = vunpack.c.l.b16 %v288
      %v353 = vunpack.c.l.b16 %v289
      %v354 = vunpack.c.l.b16 %v290
      %v355 = vunpack.c.l.b16 %v291
      %v356 = vpack.c.b16 %v349, %v348
      %v357 = vpack.c.b16 %v351, %v350
      %v358 = vpack.c.b16 %v353, %v352
      %v359 = vpack.c.b16 %v355, %v354
      %v361 = vunpack.c.l.b16 %v283
      %v362 = vunpack.c.h.b16 %v283
      %v363 = vpack.c.b16 %v361, %v361
      %v364 = vpack.c.b16 %v362, %v362
      %vm365 = vcmask 64512
      %v367 = vsel %vm365, %v356, 0
      %v370 = vsel %vm365, %v357, 0
      %v373 = vsel %vm365, %v358, 0
      %v376 = vsel %vm365, %v359, 0
      %vm378 = vcmask 1043456
      %v380 = vsel %vm378, %v363, 0
      %v383 = vsel %vm378, %v364, 0
      %385 = vmatprep.subr.bf16.mxu0 %v383
      %386 = vmatpush1.bf16.msra.mxu0 %v380
      %387 = vmatprep.subr.bf16.mxu0 0
      %388 = vmatpush1.bf16.msra.mxu0 0
      %389 = vmatprep.subr.bf16.mxu0 0
      %390 = vmatpush1.bf16.msra.mxu0 0
      %391 = vmatprep.subr.bf16.mxu0 0
      %392 = vmatpush1.bf16.msra.mxu0 0
      %393 = vmatprep.subr.bf16.mxu0 0
      %394 = vmatpush1.bf16.msra.mxu0 0
      %395 = vmatprep.subr.bf16.mxu0 0
      %396 = vmatpush1.bf16.msra.mxu0 0
      %397 = vmatprep.subr.bf16.mxu0 0
      %398 = vmatpush1.bf16.msra.mxu0 0
      %399 = vmatprep.subr.bf16.mxu0 0
      %400 = vmatpush1.bf16.msra.mxu0 0
      %401 = vmatprep.subr.bf16.mxu0 0
      %402 = vmatpush1.bf16.msra.mxu0 0
      %403 = vmatprep.subr.bf16.mxu0 0
      %404 = vmatpush1.bf16.msra.mxu0 0
      %405 = vmatprep.subr.bf16.mxu0 0
      %406 = vmatpush1.bf16.msra.mxu0 0
      %407 = vmatprep.subr.bf16.mxu0 0
      %408 = vmatpush1.bf16.msra.mxu0 0
      %409 = vmatprep.subr.bf16.mxu0 0
      %410 = vmatpush1.bf16.msra.mxu0 0
      %411 = vmatprep.subr.bf16.mxu0 0
      %412 = vmatpush1.bf16.msra.mxu0 0
      %413 = vmatprep.subr.bf16.mxu0 0
      %414 = vmatpush1.bf16.msra.mxu0 0
      %415 = vmatprep.subr.bf16.mxu0 0
      %416 = vmatpush1.bf16.msra.mxu0 0
      %417 = vmatprep.mubr.bf16.mxu0 0
      %418 = vmatmul.mubr.bf16.gmra.mrb[0].mxu0 %v367
      %v419 = vpop.f32.mrb[0].mxu0
      %v420 = vadd.f32 %v303, %v419
      %v421 = vpop.f32.mrb[0].mxu0
      %v422 = vadd.f32 %v303, %v421
      %v423 = vpop.f32.mrb[0].mxu0
      %v424 = vadd.f32 %v308, %v423
      %v425 = vpop.f32.mrb[0].mxu0
      %v426 = vadd.f32 %v308, %v425
      %427 = vmatprep.mubr.bf16.mxu0 0
      %428 = vmatmul.mubr.bf16.gmra.mrb[0].mxu0 %v370
      %v429 = vpop.f32.mrb[0].mxu0
      %v430 = vadd.f32 %v313, %v429
      %v431 = vpop.f32.mrb[0].mxu0
      %v432 = vadd.f32 %v313, %v431
      %v433 = vpop.f32.mrb[0].mxu0
      %v434 = vadd.f32 %v318, %v433
      %v435 = vpop.f32.mrb[0].mxu0
      %v436 = vadd.f32 %v318, %v435
      %437 = vmatprep.mubr.bf16.mxu0 0
      %438 = vmatmul.mubr.bf16.gmra.mrb[0].mxu0 %v373
      %v439 = vpop.f32.mrb[0].mxu0
      %v440 = vadd.f32 %v323, %v439
      %v441 = vpop.f32.mrb[0].mxu0
      %v442 = vadd.f32 %v323, %v441
      %v443 = vpop.f32.mrb[0].mxu0
      %v444 = vadd.f32 %v328, %v443
      %v445 = vpop.f32.mrb[0].mxu0
      %v446 = vadd.f32 %v328, %v445
      %447 = vmatprep.mubr.bf16.mxu0 0
      %448 = vmatmul.mubr.bf16.gmra.mrb[0].mxu0 %v376
      %v449 = vpop.f32.mrb[0].mxu0
      %v450 = vadd.f32 %v333, %v449
      %v451 = vpop.f32.mrb[0].mxu0
      %v452 = vadd.f32 %v333, %v451
      %v453 = vpop.f32.mrb[0].mxu0
      %v454 = vadd.f32 %v338, %v453
      %v455 = vpop.f32.mrb[0].mxu0
      %v456 = vadd.f32 %v338, %v455
      %457 = vdwg.mxu0
      %v458 = vmax.f32 %v420, 0.0
      %v459 = vmax.f32 %v422, 0.0
      %v460 = vmax.f32 %v424, 0.0
      %v461 = vmax.f32 %v426, 0.0
      %v462 = vmax.f32 %v430, 0.0
      %v463 = vmax.f32 %v432, 0.0
      %v464 = vmax.f32 %v434, 0.0
      %v465 = vmax.f32 %v436, 0.0
      %v466 = vmax.f32 %v440, 0.0
      %v467 = vmax.f32 %v442, 0.0
      %v468 = vmax.f32 %v444, 0.0
      %v469 = vmax.f32 %v446, 0.0
      %v470 = vmax.f32 %v450, 0.0
      %v471 = vmax.f32 %v452, 0.0
      %v472 = vmax.f32 %v454, 0.0
      %v473 = vmax.f32 %v456, 0.0
      %v474 = vpack.c.bf16 %v460, %v458
      %v475 = vpack.c.bf16 %v461, %v459
      %v476 = vpack.c.bf16 %v464, %v462
      %v477 = vpack.c.bf16 %v465, %v463
      %v478 = vpack.c.bf16 %v468, %v466
      %v479 = vpack.c.bf16 %v469, %v467
      %v480 = vpack.c.bf16 %v472, %v470
      %v481 = vpack.c.bf16 %v473, %v471
      %v482 = vld [vmem:[%s3] sm:$0xf]
      %v483 = vld [vmem:[%s3 + $0x4] sm:$0xf]
      %v484 = vld [vmem:[%s3 + $0x8] sm:$0xf]
      %v485 = vld [vmem:[%s3 + $0xc] sm:$0xf]
      %v486 = vld [vmem:[%s3 + $0x10] sm:$0xf]
      %v487 = vld [vmem:[%s3 + $0x14] sm:$0xf]
      %v488 = vld [vmem:[%s3 + $0x18] sm:$0xf]
      %v489 = vld [vmem:[%s3 + $0x1c] sm:$0xf]
      %v490 = vld [vmem:[%s4] sm:$0xff]
      %v491 = vld [vmem:[%s4 + $0x8] sm:$0xff]
      %v492 = vld [vmem:[%s4 + $0x10] sm:$0xff]
      %v493 = vld [vmem:[%s4 + $0x18] sm:$0xff]
      %v494 = vld [vmem:[%s4 + $0x20] sm:$0xff]
      %v495 = vld [vmem:[%s4 + $0x28] sm:$0xff]
      %v496 = vld [vmem:[%s4 + $0x30] sm:$0xff]
      %v497 = vld [vmem:[%s4 + $0x38] sm:$0xff]
      %499 = vset.pattern.permute.xlu0 0
      %500 = vperm.xlu0 %499, %v490
      %v501 = vpop.permute.xlu0 %500
      %504 = vset.pattern.permute.xlu0 0
      %505 = vperm.xlu0 %504, %v491
      %v506 = vpop.permute.xlu0 %505
      %509 = vset.pattern.permute.xlu0 0
      %510 = vperm.xlu0 %509, %v492
      %v511 = vpop.permute.xlu0 %510
      %514 = vset.pattern.permute.xlu0 0
      %515 = vperm.xlu0 %514, %v493
      %v516 = vpop.permute.xlu0 %515
      %519 = vset.pattern.permute.xlu0 0
      %520 = vperm.xlu0 %519, %v494
      %v521 = vpop.permute.xlu0 %520
      %524 = vset.pattern.permute.xlu0 0
      %525 = vperm.xlu0 %524, %v495
      %v526 = vpop.permute.xlu0 %525
      %529 = vset.pattern.permute.xlu0 0
      %530 = vperm.xlu0 %529, %v496
      %v531 = vpop.permute.xlu0 %530
      %534 = vset.pattern.permute.xlu0 0
      %535 = vperm.xlu0 %534, %v497
      %v536 = vpop.permute.xlu0 %535
      %v546 = vunpack.c.l.b16 %v482
      %v547 = vunpack.c.l.b16 %v483
      %v548 = vunpack.c.l.b16 %v484
      %v549 = vunpack.c.l.b16 %v485
      %v550 = vunpack.c.l.b16 %v486
      %v551 = vunpack.c.l.b16 %v487
      %v552 = vunpack.c.l.b16 %v488
      %v553 = vunpack.c.l.b16 %v489
      %v554 = vpack.c.b16 %v547, %v546
      %v555 = vpack.c.b16 %v549, %v548
      %v556 = vpack.c.b16 %v551, %v550
      %v557 = vpack.c.b16 %v553, %v552
      %vm558 = vcmask 523264
      %v560 = vsel %vm558, %v554, 0
      %v563 = vsel %vm558, %v555, 0
      %v566 = vsel %vm558, %v556, 0
      %v569 = vsel %vm558, %v557, 0
      %571 = vmatprep.subr.bf16.mxu0 %v475
      %572 = vmatpush1.bf16.msra.mxu0 %v474
      %573 = vmatprep.subr.bf16.mxu0 %v477
      %574 = vmatpush1.bf16.msra.mxu0 %v476
      %575 = vmatprep.subr.bf16.mxu0 %v479
      %576 = vmatpush1.bf16.msra.mxu0 %v478
      %577 = vmatprep.subr.bf16.mxu0 %v481
      %578 = vmatpush1.bf16.msra.mxu0 %v480
      %579 = vmatprep.subr.bf16.mxu0 0
      %580 = vmatpush1.bf16.msra.mxu0 0
      %581 = vmatprep.subr.bf16.mxu0 0
      %582 = vmatpush1.bf16.msra.mxu0 0
      %583 = vmatprep.subr.bf16.mxu0 0
      %584 = vmatpush1.bf16.msra.mxu0 0
      %585 = vmatprep.subr.bf16.mxu0 0
      %586 = vmatpush1.bf16.msra.mxu0 0
      %587 = vmatprep.subr.bf16.mxu0 0
      %588 = vmatpush1.bf16.msra.mxu0 0
      %589 = vmatprep.subr.bf16.mxu0 0
      %590 = vmatpush1.bf16.msra.mxu0 0
      %591 = vmatprep.subr.bf16.mxu0 0
      %592 = vmatpush1.bf16.msra.mxu0 0
      %593 = vmatprep.subr.bf16.mxu0 0
      %594 = vmatpush1.bf16.msra.mxu0 0
      %595 = vmatprep.subr.bf16.mxu0 0
      %596 = vmatpush1.bf16.msra.mxu0 0
      %597 = vmatprep.subr.bf16.mxu0 0
      %598 = vmatpush1.bf16.msra.mxu0 0
      %599 = vmatprep.subr.bf16.mxu0 0
      %600 = vmatpush1.bf16.msra.mxu0 0
      %601 = vmatprep.subr.bf16.mxu0 0
      %602 = vmatpush1.bf16.msra.mxu0 0
      %603 = vmatprep.mubr.bf16.mxu0 0
      %604 = vmatmul.mubr.bf16.gmra.mrb[0].mxu0 %v560
      %v605 = vpop.f32.mrb[0].mxu0
      %v606 = vadd.f32 %v501, %v605
      %v607 = vpop.f32.mrb[0].mxu0
      %v608 = vadd.f32 %v501, %v607
      %v609 = vpop.f32.mrb[0].mxu0
      %v610 = vadd.f32 %v506, %v609
      %v611 = vpop.f32.mrb[0].mxu0
      %v612 = vadd.f32 %v506, %v611
      %613 = vmatprep.mubr.bf16.mxu0 0
      %614 = vmatmul.mubr.bf16.gmra.mrb[0].mxu0 %v563
      %v615 = vpop.f32.mrb[0].mxu0
      %v616 = vadd.f32 %v511, %v615
      %v617 = vpop.f32.mrb[0].mxu0
      %v618 = vadd.f32 %v511, %v617
      %v619 = vpop.f32.mrb[0].mxu0
      %v620 = vadd.f32 %v516, %v619
      %v621 = vpop.f32.mrb[0].mxu0
      %v622 = vadd.f32 %v516, %v621
      %623 = vmatprep.mubr.bf16.mxu0 0
      %624 = vmatmul.mubr.bf16.gmra.mrb[0].mxu0 %v566
      %v625 = vpop.f32.mrb[0].mxu0
      %v626 = vadd.f32 %v521, %v625
      %v627 = vpop.f32.mrb[0].mxu0
      %v628 = vadd.f32 %v521, %v627
      %v629 = vpop.f32.mrb[0].mxu0
      %v630 = vadd.f32 %v526, %v629
      %v631 = vpop.f32.mrb[0].mxu0
      %v632 = vadd.f32 %v526, %v631
      %633 = vmatprep.mubr.bf16.mxu0 0
      %634 = vmatmul.mubr.bf16.gmra.mrb[0].mxu0 %v569
      %v635 = vpop.f32.mrb[0].mxu0
      %v636 = vadd.f32 %v531, %v635
      %v637 = vpop.f32.mrb[0].mxu0
      %v638 = vadd.f32 %v531, %v637
      %v639 = vpop.f32.mrb[0].mxu0
      %v640 = vadd.f32 %v536, %v639
      %v641 = vpop.f32.mrb[0].mxu0
      %v642 = vadd.f32 %v536, %v641
      %643 = vdwg.mxu0
      %v644 = vmax.f32 %v606, 0.0
      %v645 = vmax.f32 %v608, 0.0
      %v646 = vmax.f32 %v610, 0.0
      %v647 = vmax.f32 %v612, 0.0
      %v648 = vmax.f32 %v616, 0.0
      %v649 = vmax.f32 %v618, 0.0
      %v650 = vmax.f32 %v620, 0.0
      %v651 = vmax.f32 %v622, 0.0
      %v652 = vmax.f32 %v626, 0.0
      %v653 = vmax.f32 %v628, 0.0
      %v654 = vmax.f32 %v630, 0.0
      %v655 = vmax.f32 %v632, 0.0
      %v656 = vmax.f32 %v636, 0.0
      %v657 = vmax.f32 %v638, 0.0
      %v658 = vmax.f32 %v640, 0.0
      %v659 = vmax.f32 %v642, 0.0
      %v660 = vpack.c.bf16 %v646, %v644
      %v661 = vpack.c.bf16 %v647, %v645
      %v662 = vpack.c.bf16 %v650, %v648
      %v663 = vpack.c.bf16 %v651, %v649
      %v664 = vpack.c.bf16 %v654, %v652
      %v665 = vpack.c.bf16 %v655, %v653
      %v666 = vpack.c.bf16 %v658, %v656
      %v667 = vpack.c.bf16 %v659, %v657
      %v668 = vld [vmem:[%s5] sm:$0x3]
      %v669 = vld [vmem:[%s6] sm:$0x7]
      %671 = vset.pattern.permute.xlu0 0
      %672 = vperm.xlu0 %671, %v669
      %v673 = vpop.permute.xlu0 %672
      %v676 = vsel %vm558, %v668, 0
      %678 = vmatprep.subr.bf16.mxu0 %v661
      %679 = vmatpush1.bf16.msra.mxu0 %v660
      %680 = vmatprep.subr.bf16.mxu0 %v663
      %681 = vmatpush1.bf16.msra.mxu0 %v662
      %682 = vmatprep.subr.bf16.mxu0 %v665
      %683 = vmatpush1.bf16.msra.mxu0 %v664
      %684 = vmatprep.subr.bf16.mxu0 %v667
      %685 = vmatpush1.bf16.msra.mxu0 %v666
      %686 = vmatprep.subr.bf16.mxu0 0
      %687 = vmatpush1.bf16.msra.mxu0 0
      %688 = vmatprep.subr.bf16.mxu0 0
      %689 = vmatpush1.bf16.msra.mxu0 0
      %690 = vmatprep.subr.bf16.mxu0 0
      %691 = vmatpush1.bf16.msra.mxu0 0
      %692 = vmatprep.subr.bf16.mxu0 0
      %693 = vmatpush1.bf16.msra.mxu0 0
      %694 = vmatprep.subr.bf16.mxu0 0
      %695 = vmatpush1.bf16.msra.mxu0 0
      %696 = vmatprep.subr.bf16.mxu0 0
      %697 = vmatpush1.bf16.msra.mxu0 0
      %698 = vmatprep.subr.bf16.mxu0 0
      %699 = vmatpush1.bf16.msra.mxu0 0
      %700 = vmatprep.subr.bf16.mxu0 0
      %701 = vmatpush1.bf16.msra.mxu0 0
      %702 = vmatprep.subr.bf16.mxu0 0
      %703 = vmatpush1.bf16.msra.mxu0 0
      %704 = vmatprep.subr.bf16.mxu0 0
      %705 = vmatpush1.bf16.msra.mxu0 0
      %706 = vmatprep.subr.bf16.mxu0 0
      %707 = vmatpush1.bf16.msra.mxu0 0
      %708 = vmatprep.subr.bf16.mxu0 0
      %709 = vmatpush1.bf16.msra.mxu0 0
      %710 = vmatprep.mubr.bf16.mxu0 0
      %711 = vmatmul.mubr.bf16.gmra.mrb[0].mxu0 %v676
      %v712 = vpop.f32.mrb[0].mxu0
      %v713 = vadd.f32 %v673, %v712
      %v714 = vpop.f32.mrb[0].mxu0
      %v715 = vadd.f32 %v673, %v714
      %v716 = vpop.f32.mrb[0].mxu0
      %v717 = vpop.f32.mrb[0].mxu0
      %718 = vdwg.mxu0
      %vm719 = vcmask 1042432
      %v720 = vsel %vm719, %v713, -inf
      %v721 = vrot.slane %v720, 4
      %v722 = vmax.f32 %v720, %v721
      %v723 = vrot.slane %v722, 2
      %v724 = vmax.f32 %v722, %v723
      %v725 = vrot.slane %v724, 1
      %v726 = vmax.f32 %v724, %v725
      %v727 = vsel %vm719, %v715, -inf
      %v728 = vrot.slane %v727, 4
      %v729 = vmax.f32 %v727, %v728
      %v730 = vrot.slane %v729, 2
      %v731 = vmax.f32 %v729, %v730
      %v732 = vrot.slane %v731, 1
      %v733 = vmax.f32 %v731, %v732
      %v734 = vsub.f32 %v713, %v726
      %v735 = vsub.f32 %v715, %v733
      %v736 = vmul.f32 %v734, 1.442695
      %v737 = vpow.pop %v736
      %v738 = vmul.f32 %v735, 1.442695
      %v739 = vpow.pop %v738
      %v740 = vsel %vm719, %v737, 0.0
      %v741 = vrot.slane %v740, 4
      %v742 = vadd.f32 %v740, %v741
      %v743 = vrot.slane %v742, 2
      %v744 = vadd.f32 %v742, %v743
      %v745 = vrot.slane %v744, 1
      %v746 = vadd.f32 %v744, %v745
      %v747 = vsel %vm719, %v739, 0.0
      %v748 = vrot.slane %v747, 4
      %v749 = vadd.f32 %v747, %v748
      %v750 = vrot.slane %v749, 2
      %v751 = vadd.f32 %v749, %v750
      %v752 = vrot.slane %v751, 1
      %v753 = vadd.f32 %v751, %v752
      %v754 = vlog2.pop %v746
      %v755 = vmul.f32 %v754, 0.6931472
      %v756 = vlog2.pop %v753
      %v757 = vmul.f32 %v756, 0.6931472
      %v758 = vsub.f32 %v734, %v755
      %v759 = vsub.f32 %v735, %v757
      %v762 = vcombine.low %v758, %v759
      %764 = vst [vmem:[%s280] sm:$0x77] %v762
      %s765 = smul.u32 2, %s18
      %p766 = scmp.lt.s32.totalorder %s765, 3
      %s767 = scalar_select %p766, %s765, 3
      %s768 = smul.addr %s767, 4
      %s769 = scalar_lea.vmem %s7, %s768
      // Predicated region
      $region49: #{bike_shifter_net.1} parent=47 // pred_check
        %p770 = pneg %p188
      $region50: #{bike_shifter_net.1} parent=47 // pred_check_branch
        %772 = sbr.rel (%p770) target = $region52
      $region51: #{bike_shifter_net.1} parent=47 // pred_region
        %s773 = smul.u32 2, %s18
      $region52: #{bike_shifter_net.1} parent=47 // pred_fallthru
        _
    $region48: #{bike_shifter_net.1} parent=5 // pred_fallthru
      _
    %p774 = scmp.le.s32.totalorder 2, %s13
    // Predicated region
    $region53: #{bike_shifter_net.1} parent=5 // pred_check
      %p775 = pneg %p774
    $region54: #{bike_shifter_net.1} parent=5 // pred_check_branch
      %777 = sbr.rel (%p775) target = $region56
    $region55: #{bike_shifter_net.1} parent=5 // pred_region
      %s778 = ssub.s32 %s13, 2
      // Predicated region
      $region57: #{bike_shifter_net.1} parent=55 // pred_check
        %p779 = pneg %p194
      $region58: #{bike_shifter_net.1} parent=55 // pred_check_branch
        %781 = sbr.rel (%p779) target = $region60
      $region59: #{bike_shifter_net.1} parent=55 // pred_region
        %s782 = smul.u32 2, %s19
        %p783 = scmp.lt.s32.totalorder %s782, 3
        %s784 = scalar_select %p783, %s782, 3
        %s785 = smul.addr %s784, 4
        %s786 = scalar_lea.vmem %s7, %s785
      $region60: #{bike_shifter_net.1} parent=55 // pred_fallthru
        _
    $region56: #{bike_shifter_net.1} parent=5 // pred_fallthru
      _
  $region6: #{bike_shifter_net.1} parent=0 // loop_footer
    %s17 = sadd.s32 1, %s13
  $region7: #{bike_shifter_net.1} parent=0 // loop_footer_branch
    %12 = sbr.rel target = $region3
  $region8: #{bike_shifter_net.1} parent=0 // loop_exit
    _

</llo_original>
